<compile_context>
chip_gen: v7x
topology: tpu7x:2x2x1
jax: 0.10.0
libtpu: 0.0.40
codegen_flags: <defaults>
</compile_context>

<pallas_src>
import numpy as np
import jax
import jax.numpy as jnp
from jax.experimental import pallas as pl
from jax.experimental.pallas import tpu as pltpu

# ----------------------------- "PARAMS" setup -------------------------------
SFACTOR = 4
CF = 8                      # DCT block size (pixels per block edge)
KF = CF // SFACTOR          # coefficients kept per block axis after compression
RPIX, CPIX = 64, 64         # decompressed image size
RBLKS, CBLKS = RPIX // CF, CPIX // CF        # "newrblks" / "newcblks"
HC, WC = RBLKS * KF, CBLKS * KF              # compressed image size (16, 16)


def _dct_matrix(n: int) -> np.ndarray:
    """Orthonormal DCT-II matrix, rows = frequency basis vectors."""
    k = np.arange(n, dtype=np.float64)[:, None]
    i = np.arange(n, dtype=np.float64)[None, :]
    d = np.sqrt(2.0 / n) * np.cos(np.pi * (2.0 * i + 1.0) * k / (2.0 * n))
    d[0, :] = np.sqrt(1.0 / n)
    return d


def get_lhs_rhs_decompress():
    """Deterministic stand-in for get_lhs_rhs_decompress(newparams):
    block-diagonal inverse-DCT factors keeping KF coefficients per block.
    # TODO(synk): real helper bodies (PARAMS / get_new_params) are not in the
    # given source; this reconstructs the standard Graphcore DCT benchmark factors.
    """
    D = _dct_matrix(CF)                      # (CF, CF)
    lhs_blk = D.T[:, :KF]                    # (CF, KF)  inverse DCT, low freqs
    rhs_blk = D[:KF, :]                      # (KF, CF)
    lhs = np.zeros((RBLKS * CF, RBLKS * KF), dtype=np.float32)   # (RPIX, HC)
    rhs = np.zeros((CBLKS * KF, CBLKS * CF), dtype=np.float32)   # (WC, CPIX)
    for b in range(RBLKS):
        lhs[b * CF:(b + 1) * CF, b * KF:(b + 1) * KF] = lhs_blk
    for b in range(CBLKS):
        rhs[b * KF:(b + 1) * KF, b * CF:(b + 1) * CF] = rhs_blk
    return jnp.asarray(lhs, jnp.float32), jnp.asarray(rhs, jnp.float32)


# ------------------------------- Pallas kernel -------------------------------
def _weighted_rowsum_kernel(x_ref, w_ref, out_ref):
    # x_ref:   (ROWS_PAD, HC*WC)  all (n, c) slices, flattened & lane-dense
    # w_ref:   (ROWS_PAD, HC*WC)  broadcast weights W = outer(lhs.sum(0), rhs.sum(1))
    # out_ref: (ROWS_PAD, 128)    lane-dense slab; row r holds sum_r broadcast
    prod = x_ref[...] * w_ref[...]                       # VPU elementwise
    s = jnp.sum(prod, axis=1, keepdims=True)             # (ROWS_PAD, 1) cross-lane reduce
    out_ref[...] = jnp.broadcast_to(s, out_ref.shape)    # unmasked lane-dense store


def compressor_forward(x, lhs, rhs):
    """Equivalent of CompressorModel.forward: x (N, 3, HC, WC) -> (N, 3)."""
    N, C, Hc, Wc = x.shape
    rows = N * C
    rows_pad = max(8, ((rows + 7) // 8) * 8)

    # Algebraic hoist of the reduction through both matmuls (exact):
    #   sum(lhs @ xc @ rhs) = (lhs.sum(0)) @ xc @ (rhs.sum(1)) = sum(W * xc)
    u = jnp.sum(lhs, axis=0)                             # (HC,)
    v = jnp.sum(rhs, axis=1)                             # (WC,)
    w = (u[:, None] * v[None, :]).reshape(1, Hc * Wc)    # (1, HC*WC)
    wf = jnp.broadcast_to(w, (rows_pad, Hc * Wc)).astype(jnp.float32)

    xf = x.reshape(rows, Hc * Wc)
    xf = jnp.pad(xf, ((0, rows_pad - rows), (0, 0)))     # pad to 8 sublanes

    out = pl.pallas_call(
        _weighted_rowsum_kernel,
        out_shape=jax.ShapeDtypeStruct((rows_pad, 128), jnp.float32),
        grid=(1,),                                       # single step: whole working set in VMEM
        in_specs=[
            pl.BlockSpec((rows_pad, Hc * Wc), lambda i: (0, 0)),
            pl.BlockSpec((rows_pad, Hc * Wc), lambda i: (0, 0)),
        ],
        out_specs=pl.BlockSpec((rows_pad, 128), lambda i: (0, 0)),
        compiler_params=pltpu.CompilerParams(
            dimension_semantics=("arbitrary",)),
    )(xf, wf)

    # Glue: one scalar per row, column 0 -> (N, 3)
    return out[:rows, 0].reshape(N, C)


# ------------------------------- reference -----------------------------------
def reference_forward(x, lhs, rhs):
    # r/g/b = lhs @ x[:, c] @ rhs ; stack on dim 1 ; sum over dims [2, 3]
    y = jnp.einsum("rp,ncpq,qs->ncrs", lhs, x, rhs)
    return jnp.sum(y, axis=(2, 3))


if __name__ == "__main__":
    key = jax.random.PRNGKey(0)
    # batch=2, channels=3 (RGB), compressed spatial = 16x16 (RPIX=CPIX=64, SFACTOR=4)
    x = jax.random.normal(key, (2, 3, HC, WC), dtype=jnp.float32)

    lhs, rhs = get_lhs_rhs_decompress()

    out = compressor_forward(x, lhs, rhs)
    out = jax.block_until_ready(out)

    ref = reference_forward(x, lhs, rhs)
    assert out.shape == (2, 3), out.shape
    assert jnp.allclose(out, ref, rtol=1e-3, atol=1e-3), (out, ref)

    print("KERNEL_OK")
</pallas_src>

<mosaic_0001>
module attributes {stable_mosaic.version = 11 : i64} {
  func.func @_weighted_rowsum_kernel(%arg0: i32, %arg1: memref<8x256xf32, #tpu.memory_space<vmem>>, %arg2: memref<8x256xf32, #tpu.memory_space<vmem>>, %arg3: memref<8x128xf32, #tpu.memory_space<vmem>>) attributes {dimension_semantics = [#tpu.dimension_semantics<arbitrary>], iteration_bounds = array<i64: 1>, scalar_prefetch = 0 : i64, scratch_operands = 0 : i64, tpu.core_type = #tpu.core_type<tc>, window_params = [{pipeline_mode = #tpu.pipeline_mode<synchronous>, transform_indices = @transform_0, window_bounds = array<i64: 8, 256>}, {pipeline_mode = #tpu.pipeline_mode<synchronous>, transform_indices = @transform_1, window_bounds = array<i64: 8, 256>}, {pipeline_mode = #tpu.pipeline_mode<synchronous>, transform_indices = @transform_2, window_bounds = array<i64: 8, 128>}]} {
    %c0 = arith.constant 0 : index
    %c0_0 = arith.constant 0 : index
    %0 = vector.load %arg1[%c0, %c0_0] : memref<8x256xf32, #tpu.memory_space<vmem>>, vector<8x256xf32>
    %c0_1 = arith.constant 0 : index
    %c0_2 = arith.constant 0 : index
    %1 = vector.load %arg2[%c0_1, %c0_2] : memref<8x256xf32, #tpu.memory_space<vmem>>, vector<8x256xf32>
    %2 = arith.mulf %0, %1 : vector<8x256xf32>
    %cst = arith.constant dense<0.000000e+00> : vector<8xf32>
    %3 = vector.multi_reduction <add>, %2, %cst [1] : vector<8x256xf32> to vector<8xf32>
    %4 = vector.shape_cast %3 : vector<8xf32> to vector<8x1xf32>
    %5 = vector.shape_cast %4 : vector<8x1xf32> to vector<8x1xf32>
    %6 = vector.broadcast %5 : vector<8x1xf32> to vector<8x128xf32>
    %c0_3 = arith.constant 0 : index
    %c0_4 = arith.constant 0 : index
    %7 = vector.load %arg3[%c0_3, %c0_4] : memref<8x128xf32, #tpu.memory_space<vmem>>, vector<8x128xf32>
    tpu.vector_store %arg3[%c0_3, %c0_4], %6 {strides = array<i32>} : memref<8x128xf32, #tpu.memory_space<vmem>>, vector<8x128xf32>,
    return
  }
  func.func @transform_0(%arg0: i32) -> (i32, i32) {
    %c0_i32 = arith.constant 0 : i32
    %c0_i32_0 = arith.constant 0 : i32
    %c0_i32_1 = arith.constant 0 : i32
    return %c0_i32, %c0_i32_0 : i32, i32
  }
  func.func @transform_1(%arg0: i32) -> (i32, i32) {
    %c0_i32 = arith.constant 0 : i32
    %c0_i32_0 = arith.constant 0 : i32
    %c0_i32_1 = arith.constant 0 : i32
    return %c0_i32, %c0_i32_0 : i32, i32
  }
  func.func @transform_2(%arg0: i32) -> (i32, i32) {
    %c0_i32 = arith.constant 0 : i32
    %c0_i32_0 = arith.constant 0 : i32
    %c0_i32_1 = arith.constant 0 : i32
    return %c0_i32, %c0_i32_0 : i32, i32
  }
}

</mosaic_0001>

<llo_original>
// kernel: tpu_custom_call.1
$region0: #{tpu_custom_call.1}
  #allocation0 [shape = 'u32[]', space=smem, size = 0x4, offset = 0x4, fixed_abs, tag = 'smem constant byte address 0x4 - core index']
  #allocation1 [shape = 'u32[144,128]{1,0:T(1,128)}', space=vmem, size = 0x12000, scoped, tag = 'internal scratch']
  %s0 = inlined_call_operand.hbm [shape: f32[8,256], index: 0, kind: input, shape index: {}]
  %s1 = inlined_call_operand.hbm [shape: f32[8,256], index: 1, kind: input, shape index: {}]
  %s2 = inlined_call_operand.hbm [shape: f32[8,128], index: 2, kind: output, shape index: {}]
  %s3 = sld [smem:[#allocation0]]
  $region26: #{tpu_custom_call.1} parent=0
    _
  %s5 = ssub.s32 1, %s3
  %s6 = scalar_select 0, %s5, %s3
  $region1: #{tpu_custom_call.1} parent=0
    #allocation2 [shape = 'u8[8192]{0}', space=vmem, size = 0x2000, scoped, tag = 'input window, operand 0, single buffered']
    #allocation3 [shape = 's32[1]{0}', space=sflag, size = 0x4, scoped, tag = 'scoped memory for tpu_custom_call.1']
    #allocation4 [shape = 's32[1]{0}', space=sflag, size = 0x4, scoped, tag = 'scoped memory for tpu_custom_call.1']
    #allocation5 [shape = 'u8[8192]{0}', space=vmem, size = 0x2000, scoped, tag = 'input window, operand 1, single buffered']
    #allocation6 [shape = 's32[1]{0}', space=sflag, size = 0x4, scoped, tag = 'scoped memory for tpu_custom_call.1']
    #allocation7 [shape = 'u8[4096]{0}', space=vmem, size = 0x1000, scoped, tag = 'output window, operand 0, single buffered']
    %7 = vsyncpa [#allocation3], 0
    %8 = vsyncpa [#allocation6], 0
    %9 = vsyncpa [#allocation4], 0
    // Predicated region
    $region2: #{tpu_custom_call.1} parent=1 // pred_check
      _
    $region3: #{tpu_custom_call.1} parent=1 // pred_check_branch
      %11 = sbr.rel (0) target = $region5
    $region4: #{tpu_custom_call.1} parent=1 // pred_region
      %s13 = ssub.s32 256, 256
      %14 = vsyncadd [#allocation3], %s13
      %s16 = sshll.u32 [#allocation2], 4
      %s17 = int_to_ptr.vmem [resolvable:$true] %s16
      %19 = dma.hbm_to_vmem [thread:$0]  %s0, 256, %s17, [#allocation3]
    $region5: #{tpu_custom_call.1} parent=1 // pred_fallthru
      _
    // Predicated region
    $region6: #{tpu_custom_call.1} parent=1 // pred_check
      _
    $region7: #{tpu_custom_call.1} parent=1 // pred_check_branch
      %21 = sbr.rel (0) target = $region9
    $region8: #{tpu_custom_call.1} parent=1 // pred_region
      %s23 = ssub.s32 256, 256
      %24 = vsyncadd [#allocation6], %s23
      %s26 = sshll.u32 [#allocation5], 4
      %s27 = int_to_ptr.vmem [resolvable:$true] %s26
      %29 = dma.hbm_to_vmem [thread:$0]  %s1, 256, %s27, [#allocation6]
    $region9: #{tpu_custom_call.1} parent=1 // pred_fallthru
      _
    // Predicated region
    $region10: #{tpu_custom_call.1} parent=1 // pred_check
      _
    $region11: #{tpu_custom_call.1} parent=1 // pred_check_branch
      %31 = sbr.rel (0) target = $region13
    $region12: #{tpu_custom_call.1} parent=1 // pred_region
      %32 = dma.done [#allocation3], 256
    $region13: #{tpu_custom_call.1} parent=1 // pred_fallthru
      _
    // Predicated region
    $region14: #{tpu_custom_call.1} parent=1 // pred_check
      _
    $region15: #{tpu_custom_call.1} parent=1 // pred_check_branch
      %34 = sbr.rel (0) target = $region17
    $region16: #{tpu_custom_call.1} parent=1 // pred_region
      %35 = dma.done [#allocation6], 256
    $region17: #{tpu_custom_call.1} parent=1 // pred_fallthru
      _
    %v36 = vld [vmem:[#allocation2] sm:$0xff]
    %v37 = vld [vmem:[#allocation2 + $0x8] sm:$0xff]
    %v38 = vld [vmem:[#allocation5] sm:$0xff]
    %v39 = vld [vmem:[#allocation5 + $0x8] sm:$0xff]
    %v40 = vmul.f32 %v36, %v38
    %v41 = vmul.f32 %v37, %v39
    %v42 = vadd.f32 %v40, %v41
    %43 = vadd.xlane.f32.xlu0 %v42
    %v44 = vpop.xlane.xlu0 %43
    %45 = vst [vmem:[#allocation7] sm:$0xff] %v44
    // Predicated region
    $region18: #{tpu_custom_call.1} parent=1 // pred_check
      _
    $region19: #{tpu_custom_call.1} parent=1 // pred_check_branch
      %47 = sbr.rel (0) target = $region21
    $region20: #{tpu_custom_call.1} parent=1 // pred_region
      %s49 = ssub.s32 128, 128
      %50 = vsyncadd [#allocation4], %s49
      %s52 = sshll.u32 [#allocation7], 4
      %s53 = int_to_ptr.vmem [resolvable:$true] %s52
      %55 = dma.vmem_to_hbm [thread:$0]  %s53, 128, %s2, [#allocation4]
    $region21: #{tpu_custom_call.1} parent=1 // pred_fallthru
      _
    // Predicated region
    $region22: #{tpu_custom_call.1} parent=1 // pred_check
      _
    $region23: #{tpu_custom_call.1} parent=1 // pred_check_branch
      %57 = sbr.rel (0) target = $region25
    $region24: #{tpu_custom_call.1} parent=1 // pred_region
      %58 = dma.done [#allocation4], 128
    $region25: #{tpu_custom_call.1} parent=1 // pred_fallthru
      _
    %59 = vsyncpa [#allocation3], 1
    %60 = vsyncpa [#allocation6], 1
    %61 = vsyncpa [#allocation4], 1

</llo_original>
